<compile_context>
chip_gen: v6e
topology: v6e:2x2x1
jax: 0.10.0
libtpu: 0.0.40
codegen_flags: <defaults>
</compile_context>

<pallas_src>
import jax
import jax.numpy as jnp
from jax.experimental import pallas as pl
from jax.experimental.pallas import tpu as pltpu


def _round_up(x, m):
    return ((x + m - 1) // m) * m


def _vmem_capacity_bytes():
    """Per-core VMEM capacity; conservative fallback if query unavailable."""
    try:
        return int(pltpu.get_tpu_info().vmem_capacity_bytes)
    except Exception:
        return 64 * 1024 * 1024  # v7x per-TC VMEM (smallest of v5e/v6e/v7x)


def _combine(pool_type, avg, mx):
    if pool_type == "avg":
        return avg
    if pool_type == "max":
        return mx
    if pool_type == "avgmax":
        return 0.5 * (avg + mx)
    # 'avgmaxc': two lane columns [avg, max]; channel-cat handled in wrapper.
    return jnp.concatenate([avg, mx], axis=-1)


def _make_single_chunk_kernel(pool_type, do_sum, do_max, hw):
    """H*W fits in one lane block: load tile, reduce once, write."""
    inv_hw = 1.0 / float(hw)

    def kernel(x_ref, o_ref):
        xf = x_ref[...].astype(jnp.float32)
        avg = mx = None
        if do_sum:
            avg = jnp.sum(xf, axis=-1, keepdims=True) * inv_hw
        if do_max:
            mx = jnp.max(xf, axis=-1, keepdims=True)
        o_ref[...] = _combine(pool_type, avg, mx).astype(o_ref.dtype)

    return kernel


def _make_chunked_kernel(pool_type, do_sum, do_max, hw, tile_c, n_col):
    """Large H*W: stream 128-lane slabs into per-lane accumulators."""
    inv_hw = 1.0 / float(hw)
    rem = hw - (n_col - 1) * tile_c          # valid lanes in the last chunk
    needs_mask = rem != tile_c

    def kernel(x_ref, o_ref, *scratch):
        idx = 0
        sum_ref = max_ref = None
        if do_sum:
            sum_ref = scratch[idx]
            idx += 1
        if do_max:
            max_ref = scratch[idx]
            idx += 1

        k = pl.program_id(1)

        @pl.when(k == 0)
        def _():
            if do_sum:
                sum_ref[...] = jnp.zeros_like(sum_ref)
            if do_max:
                max_ref[...] = jnp.full_like(max_ref, -jnp.inf)

        def accumulate(n_valid):
            # Per-lane partials: 128-lane slab adds/maxes are pure VPU work;
            # the single cross-lane XLU reduce happens only at finalize.
            n_full = n_valid // 128
            rem_lanes = n_valid - n_full * 128
            for j in range(n_full):                       # static, unmasked
                slab = x_ref[:, pl.ds(j * 128, 128)]
                if do_sum:
                    sum_ref[...] += slab.astype(jnp.float32)
                if do_max:
                    max_ref[...] = jnp.maximum(max_ref[...],
                                               slab.astype(max_ref.dtype))
            if rem_lanes:                                 # the one partial slab
                slab = x_ref[:, pl.ds(n_full * 128, 128)]
                lane = jax.lax.broadcasted_iota(jnp.int32, slab.shape, 1)
                valid = lane < rem_lanes
                if do_sum:
                    sum_ref[...] += jnp.where(valid,
                                              slab.astype(jnp.float32), 0.0)
                if do_max:
                    masked = jnp.where(valid, slab.astype(max_ref.dtype),
                                       -jnp.inf)
                    max_ref[...] = jnp.maximum(max_ref[...], masked)

        if needs_mask:
            @pl.when(k != n_col - 1)
            def _():
                accumulate(tile_c)          # full chunks: no mask at all

            @pl.when(k == n_col - 1)
            def _():
                accumulate(rem)             # only the crossing chunk is masked
        else:
            accumulate(tile_c)

        @pl.when(k == n_col - 1)
        def _():
            avg = mx = None
            if do_sum:
                avg = jnp.sum(sum_ref[...], axis=-1, keepdims=True) * inv_hw
            if do_max:
                mx = jnp.max(max_ref[...].astype(jnp.float32), axis=-1,
                             keepdims=True)
            o_ref[...] = _combine(pool_type, avg, mx).astype(o_ref.dtype)

    return kernel


def adaptive_avgmax_pool2d(x, pool_type="avg", *, max_tile_c=2048):
    """Pallas equivalent of AdaptiveAvgMaxPool2d(output_size=1, pool_type).

    x: (N, C, H, W).
    Returns (N, C, 1, 1) for 'avg' / 'max' / 'avgmax',
    and (N, 2*C, 1, 1) for 'avgmaxc' (torch.cat along dim=1 semantics).
    """
    # TODO(synk): only output_size=1 (global pooling) is implemented.
    if pool_type not in ("avg", "max", "avgmax", "avgmaxc"):
        raise ValueError(f"unknown pool_type {pool_type!r}")

    N, C, H, W = x.shape
    rows, hw = N * C, H * W
    x2d = x.reshape(rows, hw)

    do_sum = pool_type in ("avg", "avgmax", "avgmaxc")
    do_max = pool_type in ("max", "avgmax", "avgmaxc")
    out_cols = 2 if pool_type == "avgmaxc" else 1

    if jnp.issubdtype(x.dtype, jnp.floating):
        max_acc_dtype = x.dtype            # max is exact; keep bf16 packed
    else:
        max_acc_dtype = jnp.float32
    itemsize = jnp.dtype(x.dtype).itemsize
    max_itemsize = jnp.dtype(max_acc_dtype).itemsize

    # ---- spatial (lane) tiling ---------------------------------------------
    max_tile_c = max(128, _round_up(max_tile_c, 128))
    chunked = hw > max_tile_c
    tile_c = max_tile_c if chunked else hw
    n_col = pl.cdiv(hw, tile_c) if chunked else 1
    padded_c = _round_up(tile_c, 128)

    # ---- row (sublane) tiling: budget from the chip's actual VMEM ----------
    vmem_cap = _vmem_capacity_bytes()
    budget = (vmem_cap // 2) - (4 << 20)          # tiles + temps, with margin
    if chunked:
        per_row = (2 * padded_c * itemsize                       # input dbuf
                   + (128 * 4 * 2 if do_sum else 0)              # sum acc/tmp
                   + (128 * max_itemsize * 2 if do_max else 0)   # max acc/tmp
                   + 128 * 4 * 2)                                # output/misc
    else:
        per_row = (2 * padded_c * itemsize                       # input dbuf
                   + (padded_c * 4 if do_sum or do_max else 0)   # f32 upcast
                   + 128 * 4 * 2)                                # output/misc
    tile_r = max(8, (budget // per_row) // 8 * 8)
    tile_r = min(tile_r, _round_up(rows, 8))
    # Keep >= 2 row blocks when possible so the "parallel" axis can shard
    # across v7x's two TensorCores (and overlap DMA/compute elsewhere).
    if _round_up(rows, 8) > 8:
        tile_r = min(tile_r, _round_up(pl.cdiv(rows, 2), 8))
    n_row = pl.cdiv(rows, tile_r)

    est = tile_r * per_row + (8 << 20)
    vmem_limit = int(min(max(est, 32 << 20), vmem_cap - (16 << 20)))

    out_shape = jax.ShapeDtypeStruct((rows, out_cols), x.dtype)

    if chunked:
        kernel = _make_chunked_kernel(pool_type, do_sum, do_max, hw, tile_c,
                                      n_col)
        scratch = []
        if do_sum:
            scratch.append(pltpu.VMEM((tile_r, 128), jnp.float32))
        if do_max:
            scratch.append(pltpu.VMEM((tile_r, 128), max_acc_dtype))
        out2d = pl.pallas_call(
            kernel,
            out_shape=out_shape,
            grid_spec=pltpu.PrefetchScalarGridSpec(
                num_scalar_prefetch=0,
                grid=(n_row, n_col),
                in_specs=[pl.BlockSpec((tile_r, tile_c), lambda i, k: (i, k))],
                out_specs=pl.BlockSpec((tile_r, out_cols),
                                       lambda i, k: (i, 0)),
                scratch_shapes=scratch,
            ),
            compiler_params=pltpu.CompilerParams(
                dimension_semantics=("parallel", "arbitrary"),
                vmem_limit_bytes=vmem_limit,
            ),
        )(x2d)
    else:
        kernel = _make_single_chunk_kernel(pool_type, do_sum, do_max, hw)
        out2d = pl.pallas_call(
            kernel,
            out_shape=out_shape,
            grid_spec=pltpu.PrefetchScalarGridSpec(
                num_scalar_prefetch=0,
                grid=(n_row,),
                in_specs=[pl.BlockSpec((tile_r, hw), lambda i: (i, 0))],
                out_specs=pl.BlockSpec((tile_r, out_cols), lambda i: (i, 0)),
            ),
            compiler_params=pltpu.CompilerParams(
                dimension_semantics=("parallel",),
                vmem_limit_bytes=vmem_limit,
            ),
        )(x2d)

    if pool_type == "avgmaxc":
        # columns are [avg, max]; cat(dim=1) -> [avg channels..., max channels...]
        out = out2d.reshape(N, C, 2).transpose(0, 2, 1).reshape(N, 2 * C, 1, 1)
    else:
        out = out2d.reshape(N, C, 1, 1)
    return out


def _reference(x, pool_type):
    xf = x.astype(jnp.float32)
    avg = jnp.mean(xf, axis=(2, 3), keepdims=True)
    mx = jnp.max(xf, axis=(2, 3), keepdims=True)
    if pool_type == "avg":
        r = avg
    elif pool_type == "max":
        r = mx
    elif pool_type == "avgmax":
        r = 0.5 * (avg + mx)
    elif pool_type == "avgmaxc":
        r = jnp.concatenate([avg, mx], axis=1)
    else:
        raise ValueError(pool_type)
    return r.astype(x.dtype)


if __name__ == "__main__":
    key = jax.random.PRNGKey(0)
    x = jax.random.normal(key, (2, 4, 16, 16), dtype=jnp.float32)

    # module default: output_size=1, pool_type='avg'
    y = adaptive_avgmax_pool2d(x, pool_type="avg")
    jax.block_until_ready(y)
    assert y.shape == (2, 4, 1, 1), y.shape

    # all selectable pool types vs pure-JAX reference (single-chunk path)
    for pt in ("avg", "max", "avgmax", "avgmaxc"):
        out = adaptive_avgmax_pool2d(x, pool_type=pt)
        jax.block_until_ready(out)
        ref = _reference(x, pt)
        assert out.shape == ref.shape, (pt, out.shape, ref.shape)
        assert jnp.allclose(out, ref, atol=1e-5, rtol=1e-5), pt

    # chunked-spatial accumulator path incl. a masked partial chunk
    # (H*W=200 with forced 128-wide chunks -> 2 chunks, last one partial)
    x2 = jax.random.normal(jax.random.PRNGKey(1), (2, 4, 10, 20),
                           dtype=jnp.float32)
    for pt in ("avg", "max", "avgmax", "avgmaxc"):
        out = adaptive_avgmax_pool2d(x2, pool_type=pt, max_tile_c=128)
        jax.block_until_ready(out)
        ref = _reference(x2, pt)
        assert out.shape == ref.shape, (pt, out.shape, ref.shape)
        assert jnp.allclose(out, ref, atol=1e-5, rtol=1e-5), pt

    # rows % tile_r != 0 (N*C=15 -> partial last row tile), both kernel paths
    x3 = jax.random.normal(jax.random.PRNGKey(2), (3, 5, 16, 16),
                           dtype=jnp.float32)
    x4 = jax.random.normal(jax.random.PRNGKey(3), (3, 5, 10, 20),
                           dtype=jnp.float32)
    for pt in ("avg", "max", "avgmax", "avgmaxc"):
        out = adaptive_avgmax_pool2d(x3, pool_type=pt)          # single-chunk
        jax.block_until_ready(out)
        ref = _reference(x3, pt)
        assert out.shape == ref.shape, (pt, out.shape, ref.shape)
        assert jnp.allclose(out, ref, atol=1e-5, rtol=1e-5), pt

        out = adaptive_avgmax_pool2d(x4, pool_type=pt, max_tile_c=128)  # chunked
        jax.block_until_ready(out)
        ref = _reference(x4, pt)
        assert out.shape == ref.shape, (pt, out.shape, ref.shape)
        assert jnp.allclose(out, ref, atol=1e-5, rtol=1e-5), pt

    # bf16 on the wire: f32 sum accumulation, native-dtype max accumulation
    xb = x.astype(jnp.bfloat16)
    outb = adaptive_avgmax_pool2d(xb, pool_type="avgmax")
    jax.block_until_ready(outb)
    refb = _reference(xb, "avgmax")
    assert jnp.allclose(outb.astype(jnp.float32), refb.astype(jnp.float32),
                        atol=1e-2, rtol=1e-2)

    xb2 = x4.astype(jnp.bfloat16)
    outb2 = adaptive_avgmax_pool2d(xb2, pool_type="avgmaxc", max_tile_c=128)
    jax.block_until_ready(outb2)
    refb2 = _reference(xb2, "avgmaxc")
    assert jnp.allclose(outb2.astype(jnp.float32), refb2.astype(jnp.float32),
                        atol=1e-2, rtol=1e-2)

    print("KERNEL_OK")
</pallas_src>

<mosaic_0001>
module attributes {stable_mosaic.version = 11 : i64} {
  func.func @kernel(%arg0: i32, %arg1: memref<8x256xf32, #tpu.memory_space<vmem>>, %arg2: memref<8x1xf32, #tpu.memory_space<vmem>>) attributes {dimension_semantics = [#tpu.dimension_semantics<parallel>], iteration_bounds = array<i64: 1>, scalar_prefetch = 0 : i64, scratch_operands = 0 : i64, tpu.core_type = #tpu.core_type<tc>, window_params = [{transform_indices = @transform_0, window_bounds = array<i64: 8, 256>}, {transform_indices = @transform_1, window_bounds = array<i64: 8, 1>}]} {
    %c0 = arith.constant 0 : index
    %c0_0 = arith.constant 0 : index
    %0 = vector.load %arg1[%c0, %c0_0] : memref<8x256xf32, #tpu.memory_space<vmem>>, vector<8x256xf32>
    %cst = arith.constant dense<0.000000e+00> : vector<8xf32>
    %1 = vector.multi_reduction <add>, %0, %cst [1] : vector<8x256xf32> to vector<8xf32>
    %2 = vector.shape_cast %1 : vector<8xf32> to vector<8x1xf32>
    %cst_1 = arith.constant 3.906250e-03 : f32
    %3 = vector.broadcast %cst_1 : f32 to vector<8x1xf32>
    %4 = arith.mulf %2, %3 : vector<8x1xf32>
    %c0_2 = arith.constant 0 : index
    %c0_3 = arith.constant 0 : index
    %5 = vector.load %arg2[%c0_2, %c0_3] : memref<8x1xf32, #tpu.memory_space<vmem>>, vector<8x1xf32>
    tpu.vector_store %arg2[%c0_2, %c0_3], %4 {strides = array<i32>} : memref<8x1xf32, #tpu.memory_space<vmem>>, vector<8x1xf32>,
    return
  }
  func.func @transform_0(%arg0: i32) -> (i32, i32) {
    %c0_i32 = arith.constant 0 : i32
    %c0_i32_0 = arith.constant 0 : i32
    return %arg0, %c0_i32 : i32, i32
  }
  func.func @transform_1(%arg0: i32) -> (i32, i32) {
    %c0_i32 = arith.constant 0 : i32
    %c0_i32_0 = arith.constant 0 : i32
    return %arg0, %c0_i32 : i32, i32
  }
}

</mosaic_0001>

<llo_original>
// kernel: tpu_custom_call.1
$region0: #{tpu_custom_call.1}
  #allocation0 [shape = 'u32[]', space=smem, size = 0x4, offset = 0x4, fixed_abs, tag = 'smem constant byte address 0x4 - core index']
  #allocation1 [shape = 'u32[144,128]{1,0:T(1,128)}', space=vmem, size = 0x12000, scoped, tag = 'internal scratch']
  %s0 = inlined_call_operand.hbm [shape: f32[8,256], index: 0, kind: input, shape index: {}]
  %s1 = inlined_call_operand.vmem [shape: f32[8,1], index: 1, kind: output, shape index: {}]
  %s2 = sld [smem:[#allocation0]]
  $region18: #{tpu_custom_call.1} parent=0
    _
  %s4 = ssub.s32 1, %s2
  %s5 = scalar_select 0, %s4, %s2
  $region1: #{tpu_custom_call.1} parent=0
    #allocation2 [shape = 'u8[8192]{0}', space=vmem, size = 0x2000, scoped, tag = 'input window, operand 0, single buffered']
    #allocation3 [shape = 's32[1]{0}', space=sflag, size = 0x4, scoped, tag = 'scoped memory for tpu_custom_call.1']
    %6 = vsyncpa [#allocation3], 0
    // Predicated region
    $region2: #{tpu_custom_call.1} parent=1 // pred_check
      _
    $region3: #{tpu_custom_call.1} parent=1 // pred_check_branch
      %8 = sbr.rel (0) target = $region5
    $region4: #{tpu_custom_call.1} parent=1 // pred_region
      %s10 = ssub.s32 256, 256
      %11 = vsyncadd [#allocation3], %s10
      %s13 = sshll.u32 [#allocation2], 4
      %s14 = int_to_ptr.vmem [resolvable:$true] %s13
      %16 = dma.hbm_to_vmem [thread:$0]  %s0, 256, %s14, [#allocation3]
    $region5: #{tpu_custom_call.1} parent=1 // pred_fallthru
      _
    // Predicated region
    $region6: #{tpu_custom_call.1} parent=1 // pred_check
      _
    $region7: #{tpu_custom_call.1} parent=1 // pred_check_branch
      %18 = sbr.rel (0) target = $region9
    $region8: #{tpu_custom_call.1} parent=1 // pred_region
      %19 = dma.done [#allocation3], 256
    $region9: #{tpu_custom_call.1} parent=1 // pred_fallthru
      _
    %v20 = vld [vmem:[#allocation2] sm:$0xff]
    %v21 = vld [vmem:[#allocation2 + $0x8] sm:$0xff]
    %v22 = vadd.f32 %v20, %v21
    %23 = vadd.xlane.f32.xlu0 %v22
    %v24 = vpop.xlane.xlu0 %23
    %v25 = vmul.f32 %v24, 0.00390625
    %vm26 = vcmask 7168
    %27 = vst.msk [vmem:[%s1] sm:$0xff] %vm26, %v25
    // Predicated region
    $region10: #{tpu_custom_call.1} parent=1 // pred_check
      _
    $region11: #{tpu_custom_call.1} parent=1 // pred_check_branch
      %29 = sbr.rel (0) target = $region13
    $region12: #{tpu_custom_call.1} parent=1 // pred_region
      _
    $region13: #{tpu_custom_call.1} parent=1 // pred_fallthru
      _
    // Predicated region
    $region14: #{tpu_custom_call.1} parent=1 // pred_check
      _
    $region15: #{tpu_custom_call.1} parent=1 // pred_check_branch
      %31 = sbr.rel (0) target = $region17
    $region16: #{tpu_custom_call.1} parent=1 // pred_region
      _
    $region17: #{tpu_custom_call.1} parent=1 // pred_fallthru
      _
    %32 = vsyncpa [#allocation3], 1

</llo_original>
